<compile_context>
chip_gen: v6e
topology: v6e:2x2x1
jax: 0.10.0
libtpu: 0.0.40
codegen_flags: <defaults>
</compile_context>

<pallas_src>
import jax
import jax.numpy as jnp
from jax import lax
from jax.experimental import pallas as pl
from jax.experimental.pallas import tpu as pltpu


def _round_up(x, m):
    return ((x + m - 1) // m) * m


def _vmem_budgets():
    """Returns (pipeline-buffer budget, scoped vmem limit) in bytes."""
    phys = 64 << 20  # conservative default: v7x-class 64 MiB per TensorCore
    try:
        cap = getattr(pltpu.get_tpu_info(), "vmem_capacity_bytes", None)
        if cap:
            phys = int(cap)
    except Exception:
        pass
    buf_budget = (2 * phys) // 5      # ~40% of physical for double-buffered blocks
    vmem_limit = (3 * phys) // 4      # scoped limit with headroom below physical
    return buf_budget, vmem_limit


def _choose_tile_m(M, T, spk_itemsize, buf_budget):
    """Rows of the [M, T] spike view processed per grid step.

    VMEM accounting per row (worst case, lane padding to 128 included):
      2 double-buffered spike blocks + 2 double-buffered [., 1] f32 target
      blocks + one f32 temp row of headroom for the in-kernel upcast+reduce.
    """
    lane_t = _round_up(max(T, 1), 128)
    per_row = 2 * lane_t * spk_itemsize + 2 * 128 * 4 + lane_t * 4
    tile_m = max(8, (buf_budget // per_row) // 8 * 8)
    tile_m = min(tile_m, _round_up(M, 8))
    return tile_m


def _make_kernel(desired, undesired, tile_m, total_m, need_tail_mask):
    desired = float(desired)
    undesired = float(undesired)

    def kernel(spk_ref, tgt_ref, out_ref):
        # [tile_m, T] native dtype -> f32 (no-op for f32 inputs).
        # TODO(synk): if bundle dumps show vst spills for bf16 inputs with big
        # tiles, restructure as a fori_loop over 8-sublane chunks.
        x = spk_ref[...].astype(jnp.float32)
        count = jnp.sum(x, axis=-1, keepdims=True)      # [tile_m, 1] lane reduce (XLU)
        tgt = tgt_ref[...]                              # [tile_m, 1] f32

        # Un-scaled delta d = count - target = n_steps * delta; sign tests are
        # unchanged (n_steps > 0), so the /n_steps folds into the final scale.
        d = count - tgt

        # Step 1 (PyTorch): zero delta where target != undesired AND delta >= 0.
        d = jnp.where(jnp.logical_or(tgt == undesired, d < 0.0), d, 0.0)
        # Step 2 (PyTorch): zero delta where target != desired AND delta <= 0.
        d = jnp.where(jnp.logical_or(tgt == desired, d > 0.0), d, 0.0)

        if need_tail_mask:
            # Ragged tail: rows past M hold unspecified data; zero their deltas.
            row = (pl.program_id(0) * tile_m
                   + lax.broadcasted_iota(jnp.int32, (tile_m, 1), 0))
            d = jnp.where(row < total_m, d, 0.0)

        # Per-tile partial sum, written lane-dense (128 wide) -> unmasked store.
        partial = jnp.sum(d * d)
        out_ref[...] = jnp.broadcast_to(partial, (1, 1, 128))

    return kernel


def spike_count_loss(outputs, label, desired_count, undesired_count):
    """outputs: [N, C, H, W, T] (any float dtype), label: [N] int -> scalar f32 loss."""
    N, C, H, W, T = outputs.shape
    M = N * C * H * W

    # Target (plain JAX glue): undesired everywhere except (n, label[n], 0, 0),
    # matching torch.scatter_ with an index of shape [N, 1, 1, 1].
    target = jnp.full((N, C, H, W), float(undesired_count), dtype=jnp.float32)
    target = target.at[jnp.arange(N), label, 0, 0].set(float(desired_count))
    tgt = target.reshape(M, 1)

    # Free view (T is innermost): no transpose, no padding, no extra HBM pass;
    # the kernel reads the spikes in their native dtype and upcasts in VMEM.
    spikes = outputs.reshape(M, T)

    buf_budget, vmem_limit = _vmem_budgets()
    tile_m = _choose_tile_m(M, T, jnp.dtype(spikes.dtype).itemsize, buf_budget)
    num_tiles = (M + tile_m - 1) // tile_m
    need_tail_mask = (M % tile_m) != 0

    kernel = _make_kernel(desired_count, undesired_count, tile_m, M, need_tail_mask)

    partials = pl.pallas_call(
        kernel,
        out_shape=jax.ShapeDtypeStruct((num_tiles, 1, 128), jnp.float32),
        grid_spec=pltpu.PrefetchScalarGridSpec(
            num_scalar_prefetch=0,
            grid=(num_tiles,),
            in_specs=[
                pl.BlockSpec((tile_m, T), lambda i: (i, 0)),   # contiguous spike chunk
                pl.BlockSpec((tile_m, 1), lambda i: (i, 0)),   # matching target column
            ],
            out_specs=pl.BlockSpec((1, 1, 128), lambda i: (i, 0, 0)),
        ),
        compiler_params=pltpu.CompilerParams(
            dimension_semantics=("parallel",),   # independent tiles -> both TCs on v7x
            vmem_limit_bytes=vmem_limit,
        ),
    )(spikes, tgt)

    # loss = 0.5 * T * sum(((count - tgt)/T)^2) = (0.5 / T) * sum((count - tgt)^2)
    return (0.5 / T) * jnp.sum(partials[:, 0, 0])


def spike_count_loss_ref(outputs, label, desired_count, undesired_count):
    """Pure-JAX reference mirroring the PyTorch module step-by-step."""
    N, C, H, W, T = outputs.shape
    target = jnp.full((N, C, H, W), float(undesired_count), dtype=jnp.float32)
    target = target.at[jnp.arange(N), label, 0, 0].set(float(desired_count))

    out_count = jnp.sum(outputs.astype(jnp.float32), axis=4)
    delta = (out_count - target) / T
    mask = jnp.ones_like(out_count)
    mask = jnp.where(target == undesired_count, 0.0, mask)
    mask = jnp.where(delta < 0, 0.0, mask)
    delta = jnp.where(mask == 1, 0.0, delta)
    mask = jnp.ones_like(out_count)
    mask = jnp.where(target == desired_count, 0.0, mask)
    mask = jnp.where(delta > 0, 0.0, mask)
    delta = jnp.where(mask == 1, 0.0, delta)
    delta = jnp.repeat(delta[..., None], T, axis=-1)
    return 0.5 * jnp.sum(delta ** 2)


if __name__ == "__main__":
    DESIRED_COUNT = 5
    UNDESIRED_COUNT = 1

    key = jax.random.PRNGKey(0)
    k1, k2 = jax.random.split(key)

    # Small shapes: batch=2, channels(classes)=4, spatial=4x4, time steps=8.
    N, C, H, W, T = 2, 4, 4, 4, 8
    # Spike trains: binary {0, 1} float32 (kernel accepts native dtype, upcasts inside).
    outputs = jax.random.bernoulli(k1, p=0.5, shape=(N, C, H, W, T)).astype(jnp.float32)
    label = jax.random.randint(k2, (N,), 0, C, dtype=jnp.int32)

    loss = spike_count_loss(outputs, label, DESIRED_COUNT, UNDESIRED_COUNT)
    loss = jax.block_until_ready(loss)

    ref = spike_count_loss_ref(outputs, label, DESIRED_COUNT, UNDESIRED_COUNT)
    ref = jax.block_until_ready(ref)

    assert jnp.allclose(loss, ref, rtol=1e-5, atol=1e-5), (loss, ref)
    print("KERNEL_OK")
</pallas_src>

<mosaic_0001>
module attributes {stable_mosaic.version = 11 : i64} {
  func.func @kernel(%arg0: i32, %arg1: memref<128x8xf32, #tpu.memory_space<vmem>>, %arg2: memref<128x1xf32, #tpu.memory_space<vmem>>, %arg3: memref<1x1x128xf32, #tpu.memory_space<vmem>>) attributes {dimension_semantics = [#tpu.dimension_semantics<parallel>], iteration_bounds = array<i64: 1>, scalar_prefetch = 0 : i64, scratch_operands = 0 : i64, tpu.core_type = #tpu.core_type<tc>, window_params = [{transform_indices = @transform_0, window_bounds = array<i64: 128, 8>}, {transform_indices = @transform_1, window_bounds = array<i64: 128, 1>}, {transform_indices = @transform_2, window_bounds = array<i64: 1, 1, 128>}]} {
    %c0 = arith.constant 0 : index
    %c0_0 = arith.constant 0 : index
    %0 = vector.load %arg1[%c0, %c0_0] : memref<128x8xf32, #tpu.memory_space<vmem>>, vector<128x8xf32>
    %cst = arith.constant dense<0.000000e+00> : vector<128xf32>
    %1 = vector.multi_reduction <add>, %0, %cst [1] : vector<128x8xf32> to vector<128xf32>
    %2 = vector.shape_cast %1 : vector<128xf32> to vector<128x1xf32>
    %c0_1 = arith.constant 0 : index
    %c0_2 = arith.constant 0 : index
    %3 = vector.load %arg2[%c0_1, %c0_2] : memref<128x1xf32, #tpu.memory_space<vmem>>, vector<128x1xf32>
    %4 = arith.subf %2, %3 : vector<128x1xf32>
    %cst_3 = arith.constant 1.000000e+00 : f32
    %5 = vector.broadcast %cst_3 : f32 to vector<128x1xf32>
    %6 = arith.cmpf oeq, %3, %5 : vector<128x1xf32>
    %cst_4 = arith.constant 0.000000e+00 : f32
    %7 = vector.broadcast %cst_4 : f32 to vector<128x1xf32>
    %8 = arith.cmpf olt, %4, %7 : vector<128x1xf32>
    %9 = arith.ori %6, %8 : vector<128x1xi1>
    %cst_5 = arith.constant 0.000000e+00 : f32
    %10 = vector.broadcast %cst_5 : f32 to vector<128x1xf32>
    %11 = arith.select %9, %4, %10 : vector<128x1xi1>, vector<128x1xf32>
    %cst_6 = arith.constant 5.000000e+00 : f32
    %12 = vector.broadcast %cst_6 : f32 to vector<128x1xf32>
    %13 = arith.cmpf oeq, %3, %12 : vector<128x1xf32>
    %cst_7 = arith.constant 0.000000e+00 : f32
    %14 = vector.broadcast %cst_7 : f32 to vector<128x1xf32>
    %15 = arith.cmpf ogt, %11, %14 : vector<128x1xf32>
    %16 = arith.ori %13, %15 : vector<128x1xi1>
    %cst_8 = arith.constant 0.000000e+00 : f32
    %17 = vector.broadcast %cst_8 : f32 to vector<128x1xf32>
    %18 = arith.select %16, %11, %17 : vector<128x1xi1>, vector<128x1xf32>
    %19 = arith.mulf %18, %18 : vector<128x1xf32>
    %20 = vector.shape_cast %19 : vector<128x1xf32> to vector<1x128x1xf32>
    %cst_9 = arith.constant dense<0.000000e+00> : vector<1xf32>
    %21 = vector.multi_reduction <add>, %20, %cst_9 [1, 2] : vector<1x128x1xf32> to vector<1xf32>
    %22 = vector.shape_cast %21 : vector<1xf32> to vector<1x1x1xf32>
    %23 = vector.extract %22[0, 0, 0] : f32 from vector<1x1x1xf32>
    %24 = vector.broadcast %23 : f32 to vector<1x1x128xf32>
    %c0_10 = arith.constant 0 : index
    %c0_11 = arith.constant 0 : index
    %c0_12 = arith.constant 0 : index
    %25 = vector.load %arg3[%c0_10, %c0_11, %c0_12] : memref<1x1x128xf32, #tpu.memory_space<vmem>>, vector<1x1x128xf32>
    tpu.vector_store %arg3[%c0_10, %c0_11, %c0_12], %24 {strides = array<i32>} : memref<1x1x128xf32, #tpu.memory_space<vmem>>, vector<1x1x128xf32>,
    return
  }
  func.func @transform_0(%arg0: i32) -> (i32, i32) {
    %c0_i32 = arith.constant 0 : i32
    %c0_i32_0 = arith.constant 0 : i32
    return %arg0, %c0_i32 : i32, i32
  }
  func.func @transform_1(%arg0: i32) -> (i32, i32) {
    %c0_i32 = arith.constant 0 : i32
    %c0_i32_0 = arith.constant 0 : i32
    return %arg0, %c0_i32 : i32, i32
  }
  func.func @transform_2(%arg0: i32) -> (i32, i32, i32) {
    %c0_i32 = arith.constant 0 : i32
    %c0_i32_0 = arith.constant 0 : i32
    %c0_i32_1 = arith.constant 0 : i32
    return %arg0, %c0_i32, %c0_i32_0 : i32, i32, i32
  }
}

</mosaic_0001>

<llo_original>
// kernel: tpu_custom_call.1
$region0: #{tpu_custom_call.1}
  #allocation0 [shape = 'u32[]', space=smem, size = 0x4, offset = 0x4, fixed_abs, tag = 'smem constant byte address 0x4 - core index']
  #allocation1 [shape = 'u32[144,128]{1,0:T(1,128)}', space=vmem, size = 0x12000, scoped, tag = 'internal scratch']
  %s0 = inlined_call_operand.vmem [shape: f32[128,8], index: 0, kind: input, shape index: {}]
  %s1 = inlined_call_operand.vmem [shape: f32[128,1], index: 1, kind: input, shape index: {}]
  %s2 = inlined_call_operand.hbm [shape: f32[1,1,128], index: 2, kind: output, shape index: {}]
  %s3 = sld [smem:[#allocation0]]
  $region18: #{tpu_custom_call.1} parent=0
    _
  %s5 = ssub.s32 1, %s3
  %s6 = scalar_select 0, %s5, %s3
  $region1: #{tpu_custom_call.1} parent=0
    #allocation2 [shape = 'u8[512]{0}', space=vmem, size = 0x400, scoped, tag = 'output window, operand 0, single buffered']
    #allocation3 [shape = 's32[1]{0}', space=sflag, size = 0x4, scoped, tag = 'scoped memory for tpu_custom_call.1']
    %7 = vsyncpa [#allocation3], 0
    // Predicated region
    $region2: #{tpu_custom_call.1} parent=1 // pred_check
      _
    $region3: #{tpu_custom_call.1} parent=1 // pred_check_branch
      %9 = sbr.rel (0) target = $region5
    $region4: #{tpu_custom_call.1} parent=1 // pred_region
      _
    $region5: #{tpu_custom_call.1} parent=1 // pred_fallthru
      _
    // Predicated region
    $region6: #{tpu_custom_call.1} parent=1 // pred_check
      _
    $region7: #{tpu_custom_call.1} parent=1 // pred_check_branch
      %11 = sbr.rel (0) target = $region9
    $region8: #{tpu_custom_call.1} parent=1 // pred_region
      _
    $region9: #{tpu_custom_call.1} parent=1 // pred_fallthru
      _
    %v12 = vld [vmem:[%s0] sm:$0xff]
    %v13 = vld [vmem:[%s0 + $0x8] sm:$0xff]
    %v14 = vld [vmem:[%s0 + $0x10] sm:$0xff]
    %v15 = vld [vmem:[%s0 + $0x18] sm:$0xff]
    %v16 = vld [vmem:[%s0 + $0x20] sm:$0xff]
    %v17 = vld [vmem:[%s0 + $0x28] sm:$0xff]
    %v18 = vld [vmem:[%s0 + $0x30] sm:$0xff]
    %v19 = vld [vmem:[%s0 + $0x38] sm:$0xff]
    %v20 = vld [vmem:[%s0 + $0x40] sm:$0xff]
    %v21 = vld [vmem:[%s0 + $0x48] sm:$0xff]
    %v22 = vld [vmem:[%s0 + $0x50] sm:$0xff]
    %v23 = vld [vmem:[%s0 + $0x58] sm:$0xff]
    %v24 = vld [vmem:[%s0 + $0x60] sm:$0xff]
    %v25 = vld [vmem:[%s0 + $0x68] sm:$0xff]
    %v26 = vld [vmem:[%s0 + $0x70] sm:$0xff]
    %v27 = vld [vmem:[%s0 + $0x78] sm:$0xff]
    %vm28 = vcmask 64512
    %v29 = vsel %vm28, %v12, 0.0
    %30 = vadd.xlane.f32.xlu0 %v29
    %v31 = vpop.xlane.xlu0 %30
    %v32 = vsel %vm28, %v13, 0.0
    %33 = vadd.xlane.f32.xlu0 %v32
    %v34 = vpop.xlane.xlu0 %33
    %v35 = vsel %vm28, %v14, 0.0
    %36 = vadd.xlane.f32.xlu0 %v35
    %v37 = vpop.xlane.xlu0 %36
    %v38 = vsel %vm28, %v15, 0.0
    %39 = vadd.xlane.f32.xlu0 %v38
    %v40 = vpop.xlane.xlu0 %39
    %v41 = vsel %vm28, %v16, 0.0
    %42 = vadd.xlane.f32.xlu0 %v41
    %v43 = vpop.xlane.xlu0 %42
    %v44 = vsel %vm28, %v17, 0.0
    %45 = vadd.xlane.f32.xlu0 %v44
    %v46 = vpop.xlane.xlu0 %45
    %v47 = vsel %vm28, %v18, 0.0
    %48 = vadd.xlane.f32.xlu0 %v47
    %v49 = vpop.xlane.xlu0 %48
    %v50 = vsel %vm28, %v19, 0.0
    %51 = vadd.xlane.f32.xlu0 %v50
    %v52 = vpop.xlane.xlu0 %51
    %v53 = vsel %vm28, %v20, 0.0
    %54 = vadd.xlane.f32.xlu0 %v53
    %v55 = vpop.xlane.xlu0 %54
    %v56 = vsel %vm28, %v21, 0.0
    %57 = vadd.xlane.f32.xlu0 %v56
    %v58 = vpop.xlane.xlu0 %57
    %v59 = vsel %vm28, %v22, 0.0
    %60 = vadd.xlane.f32.xlu0 %v59
    %v61 = vpop.xlane.xlu0 %60
    %v62 = vsel %vm28, %v23, 0.0
    %63 = vadd.xlane.f32.xlu0 %v62
    %v64 = vpop.xlane.xlu0 %63
    %v65 = vsel %vm28, %v24, 0.0
    %66 = vadd.xlane.f32.xlu0 %v65
    %v67 = vpop.xlane.xlu0 %66
    %v68 = vsel %vm28, %v25, 0.0
    %69 = vadd.xlane.f32.xlu0 %v68
    %v70 = vpop.xlane.xlu0 %69
    %v71 = vsel %vm28, %v26, 0.0
    %72 = vadd.xlane.f32.xlu0 %v71
    %v73 = vpop.xlane.xlu0 %72
    %v74 = vsel %vm28, %v27, 0.0
    %75 = vadd.xlane.f32.xlu0 %v74
    %v76 = vpop.xlane.xlu0 %75
    %v77 = vld [vmem:[%s1] sm:$0xff]
    %v78 = vld [vmem:[%s1 + $0x8] sm:$0xff]
    %v79 = vld [vmem:[%s1 + $0x10] sm:$0xff]
    %v80 = vld [vmem:[%s1 + $0x18] sm:$0xff]
    %v81 = vld [vmem:[%s1 + $0x20] sm:$0xff]
    %v82 = vld [vmem:[%s1 + $0x28] sm:$0xff]
    %v83 = vld [vmem:[%s1 + $0x30] sm:$0xff]
    %v84 = vld [vmem:[%s1 + $0x38] sm:$0xff]
    %v85 = vld [vmem:[%s1 + $0x40] sm:$0xff]
    %v86 = vld [vmem:[%s1 + $0x48] sm:$0xff]
    %v87 = vld [vmem:[%s1 + $0x50] sm:$0xff]
    %v88 = vld [vmem:[%s1 + $0x58] sm:$0xff]
    %v89 = vld [vmem:[%s1 + $0x60] sm:$0xff]
    %v90 = vld [vmem:[%s1 + $0x68] sm:$0xff]
    %v91 = vld [vmem:[%s1 + $0x70] sm:$0xff]
    %v92 = vld [vmem:[%s1 + $0x78] sm:$0xff]
    %v93 = vsub.f32 %v31, %v77
    %v94 = vsub.f32 %v34, %v78
    %v95 = vsub.f32 %v37, %v79
    %v96 = vsub.f32 %v40, %v80
    %v97 = vsub.f32 %v43, %v81
    %v98 = vsub.f32 %v46, %v82
    %v99 = vsub.f32 %v49, %v83
    %v100 = vsub.f32 %v52, %v84
    %v101 = vsub.f32 %v55, %v85
    %v102 = vsub.f32 %v58, %v86
    %v103 = vsub.f32 %v61, %v87
    %v104 = vsub.f32 %v64, %v88
    %v105 = vsub.f32 %v67, %v89
    %v106 = vsub.f32 %v70, %v90
    %v107 = vsub.f32 %v73, %v91
    %v108 = vsub.f32 %v76, %v92
    %vm109 = vcmp.eq.f32.partialorder %v77, 1.0
    %vm110 = vcmp.eq.f32.partialorder %v78, 1.0
    %vm111 = vcmp.eq.f32.partialorder %v79, 1.0
    %vm112 = vcmp.eq.f32.partialorder %v80, 1.0
    %vm113 = vcmp.eq.f32.partialorder %v81, 1.0
    %vm114 = vcmp.eq.f32.partialorder %v82, 1.0
    %vm115 = vcmp.eq.f32.partialorder %v83, 1.0
    %vm116 = vcmp.eq.f32.partialorder %v84, 1.0
    %vm117 = vcmp.eq.f32.partialorder %v85, 1.0
    %vm118 = vcmp.eq.f32.partialorder %v86, 1.0
    %vm119 = vcmp.eq.f32.partialorder %v87, 1.0
    %vm120 = vcmp.eq.f32.partialorder %v88, 1.0
    %vm121 = vcmp.eq.f32.partialorder %v89, 1.0
    %vm122 = vcmp.eq.f32.partialorder %v90, 1.0
    %vm123 = vcmp.eq.f32.partialorder %v91, 1.0
    %vm124 = vcmp.eq.f32.partialorder %v92, 1.0
    %vm125 = vcmp.lt.f32.partialorder %v93, 0.0
    %vm126 = vcmp.lt.f32.partialorder %v94, 0.0
    %vm127 = vcmp.lt.f32.partialorder %v95, 0.0
    %vm128 = vcmp.lt.f32.partialorder %v96, 0.0
    %vm129 = vcmp.lt.f32.partialorder %v97, 0.0
    %vm130 = vcmp.lt.f32.partialorder %v98, 0.0
    %vm131 = vcmp.lt.f32.partialorder %v99, 0.0
    %vm132 = vcmp.lt.f32.partialorder %v100, 0.0
    %vm133 = vcmp.lt.f32.partialorder %v101, 0.0
    %vm134 = vcmp.lt.f32.partialorder %v102, 0.0
    %vm135 = vcmp.lt.f32.partialorder %v103, 0.0
    %vm136 = vcmp.lt.f32.partialorder %v104, 0.0
    %vm137 = vcmp.lt.f32.partialorder %v105, 0.0
    %vm138 = vcmp.lt.f32.partialorder %v106, 0.0
    %vm139 = vcmp.lt.f32.partialorder %v107, 0.0
    %vm140 = vcmp.lt.f32.partialorder %v108, 0.0
    %vm141 = vmor %vm109, %vm125
    %vm142 = vmor %vm110, %vm126
    %vm143 = vmor %vm111, %vm127
    %vm144 = vmor %vm112, %vm128
    %vm145 = vmor %vm113, %vm129
    %vm146 = vmor %vm114, %vm130
    %vm147 = vmor %vm115, %vm131
    %vm148 = vmor %vm116, %vm132
    %vm149 = vmor %vm117, %vm133
    %vm150 = vmor %vm118, %vm134
    %vm151 = vmor %vm119, %vm135
    %vm152 = vmor %vm120, %vm136
    %vm153 = vmor %vm121, %vm137
    %vm154 = vmor %vm122, %vm138
    %vm155 = vmor %vm123, %vm139
    %vm156 = vmor %vm124, %vm140
    %v157 = vsel %vm141, %v93, 0.0
    %v158 = vsel %vm142, %v94, 0.0
    %v159 = vsel %vm143, %v95, 0.0
    %v160 = vsel %vm144, %v96, 0.0
    %v161 = vsel %vm145, %v97, 0.0
    %v162 = vsel %vm146, %v98, 0.0
    %v163 = vsel %vm147, %v99, 0.0
    %v164 = vsel %vm148, %v100, 0.0
    %v165 = vsel %vm149, %v101, 0.0
    %v166 = vsel %vm150, %v102, 0.0
    %v167 = vsel %vm151, %v103, 0.0
    %v168 = vsel %vm152, %v104, 0.0
    %v169 = vsel %vm153, %v105, 0.0
    %v170 = vsel %vm154, %v106, 0.0
    %v171 = vsel %vm155, %v107, 0.0
    %v172 = vsel %vm156, %v108, 0.0
    %vm173 = vcmp.eq.f32.partialorder %v77, 5.0
    %vm174 = vcmp.eq.f32.partialorder %v78, 5.0
    %vm175 = vcmp.eq.f32.partialorder %v79, 5.0
    %vm176 = vcmp.eq.f32.partialorder %v80, 5.0
    %vm177 = vcmp.eq.f32.partialorder %v81, 5.0
    %vm178 = vcmp.eq.f32.partialorder %v82, 5.0
    %vm179 = vcmp.eq.f32.partialorder %v83, 5.0
    %vm180 = vcmp.eq.f32.partialorder %v84, 5.0
    %vm181 = vcmp.eq.f32.partialorder %v85, 5.0
    %vm182 = vcmp.eq.f32.partialorder %v86, 5.0
    %vm183 = vcmp.eq.f32.partialorder %v87, 5.0
    %vm184 = vcmp.eq.f32.partialorder %v88, 5.0
    %vm185 = vcmp.eq.f32.partialorder %v89, 5.0
    %vm186 = vcmp.eq.f32.partialorder %v90, 5.0
    %vm187 = vcmp.eq.f32.partialorder %v91, 5.0
    %vm188 = vcmp.eq.f32.partialorder %v92, 5.0
    %vm189 = vcmp.gt.f32.partialorder %v157, 0.0
    %vm190 = vcmp.gt.f32.partialorder %v158, 0.0
    %vm191 = vcmp.gt.f32.partialorder %v159, 0.0
    %vm192 = vcmp.gt.f32.partialorder %v160, 0.0
    %vm193 = vcmp.gt.f32.partialorder %v161, 0.0
    %vm194 = vcmp.gt.f32.partialorder %v162, 0.0
    %vm195 = vcmp.gt.f32.partialorder %v163, 0.0
    %vm196 = vcmp.gt.f32.partialorder %v164, 0.0
    %vm197 = vcmp.gt.f32.partialorder %v165, 0.0
    %vm198 = vcmp.gt.f32.partialorder %v166, 0.0
    %vm199 = vcmp.gt.f32.partialorder %v167, 0.0
    %vm200 = vcmp.gt.f32.partialorder %v168, 0.0
    %vm201 = vcmp.gt.f32.partialorder %v169, 0.0
    %vm202 = vcmp.gt.f32.partialorder %v170, 0.0
    %vm203 = vcmp.gt.f32.partialorder %v171, 0.0
    %vm204 = vcmp.gt.f32.partialorder %v172, 0.0
    %vm205 = vmor %vm173, %vm189
    %vm206 = vmor %vm174, %vm190
    %vm207 = vmor %vm175, %vm191
    %vm208 = vmor %vm176, %vm192
    %vm209 = vmor %vm177, %vm193
    %vm210 = vmor %vm178, %vm194
    %vm211 = vmor %vm179, %vm195
    %vm212 = vmor %vm180, %vm196
    %vm213 = vmor %vm181, %vm197
    %vm214 = vmor %vm182, %vm198
    %vm215 = vmor %vm183, %vm199
    %vm216 = vmor %vm184, %vm200
    %vm217 = vmor %vm185, %vm201
    %vm218 = vmor %vm186, %vm202
    %vm219 = vmor %vm187, %vm203
    %vm220 = vmor %vm188, %vm204
    %v221 = vsel %vm205, %v157, 0.0
    %v222 = vsel %vm206, %v158, 0.0
    %v223 = vsel %vm207, %v159, 0.0
    %v224 = vsel %vm208, %v160, 0.0
    %v225 = vsel %vm209, %v161, 0.0
    %v226 = vsel %vm210, %v162, 0.0
    %v227 = vsel %vm211, %v163, 0.0
    %v228 = vsel %vm212, %v164, 0.0
    %v229 = vsel %vm213, %v165, 0.0
    %v230 = vsel %vm214, %v166, 0.0
    %v231 = vsel %vm215, %v167, 0.0
    %v232 = vsel %vm216, %v168, 0.0
    %v233 = vsel %vm217, %v169, 0.0
    %v234 = vsel %vm218, %v170, 0.0
    %v235 = vsel %vm219, %v171, 0.0
    %v236 = vsel %vm220, %v172, 0.0
    %v237 = vmul.f32 %v221, %v221
    %v238 = vmul.f32 %v222, %v222
    %v239 = vmul.f32 %v223, %v223
    %v240 = vmul.f32 %v224, %v224
    %v241 = vmul.f32 %v225, %v225
    %v242 = vmul.f32 %v226, %v226
    %v243 = vmul.f32 %v227, %v227
    %v244 = vmul.f32 %v228, %v228
    %v245 = vmul.f32 %v229, %v229
    %v246 = vmul.f32 %v230, %v230
    %v247 = vmul.f32 %v231, %v231
    %v248 = vmul.f32 %v232, %v232
    %v249 = vmul.f32 %v233, %v233
    %v250 = vmul.f32 %v234, %v234
    %v251 = vmul.f32 %v235, %v235
    %v252 = vmul.f32 %v236, %v236
    %vm253 = vcmask 7168
    %v254 = vsel %vm253, %v237, 0.0
    %v255 = vsel %vm253, %v238, 0.0
    %v256 = vadd.f32 %v254, %v255
    %v257 = vsel %vm253, %v239, 0.0
    %v258 = vadd.f32 %v256, %v257
    %v259 = vsel %vm253, %v240, 0.0
    %v260 = vadd.f32 %v258, %v259
    %v261 = vsel %vm253, %v241, 0.0
    %v262 = vadd.f32 %v260, %v261
    %v263 = vsel %vm253, %v242, 0.0
    %v264 = vadd.f32 %v262, %v263
    %v265 = vsel %vm253, %v243, 0.0
    %v266 = vadd.f32 %v264, %v265
    %v267 = vsel %vm253, %v244, 0.0
    %v268 = vadd.f32 %v266, %v267
    %v269 = vsel %vm253, %v245, 0.0
    %v270 = vadd.f32 %v268, %v269
    %v271 = vsel %vm253, %v246, 0.0
    %v272 = vadd.f32 %v270, %v271
    %v273 = vsel %vm253, %v247, 0.0
    %v274 = vadd.f32 %v272, %v273
    %v275 = vsel %vm253, %v248, 0.0
    %v276 = vadd.f32 %v274, %v275
    %v277 = vsel %vm253, %v249, 0.0
    %v278 = vadd.f32 %v276, %v277
    %v279 = vsel %vm253, %v250, 0.0
    %v280 = vadd.f32 %v278, %v279
    %v281 = vsel %vm253, %v251, 0.0
    %v282 = vadd.f32 %v280, %v281
    %v283 = vsel %vm253, %v252, 0.0
    %v284 = vadd.f32 %v282, %v283
    %285 = vadd.xlane.f32.xlu0 %v284
    %v286 = vpop.xlane.xlu0 %285
    %v287 = vrot.slane %v286, 4
    %v288 = vadd.f32 %v286, %v287
    %v289 = vrot.slane %v288, 2
    %v290 = vadd.f32 %v288, %v289
    %v291 = vrot.slane %v290, 1
    %v292 = vadd.f32 %v290, %v291
    %s293 = vtos %v292
    %v294 = vstv %s293
    %295 = vst [vmem:[#allocation2] sm:$0x1] %v294
    // Predicated region
    $region10: #{tpu_custom_call.1} parent=1 // pred_check
      _
    $region11: #{tpu_custom_call.1} parent=1 // pred_check_branch
      %297 = sbr.rel (0) target = $region13
    $region12: #{tpu_custom_call.1} parent=1 // pred_region
      %s299 = ssub.s32 16, 16
      %300 = vsyncadd [#allocation3], %s299
      %s302 = sshll.u32 [#allocation2], 4
      %s303 = int_to_ptr.vmem [resolvable:$true] %s302
      %305 = dma.vmem_to_hbm [thread:$0]  %s303, 16, %s2, [#allocation3]
    $region13: #{tpu_custom_call.1} parent=1 // pred_fallthru
      _
    // Predicated region
    $region14: #{tpu_custom_call.1} parent=1 // pred_check
      _
    $region15: #{tpu_custom_call.1} parent=1 // pred_check_branch
      %307 = sbr.rel (0) target = $region17
    $region16: #{tpu_custom_call.1} parent=1 // pred_region
      %308 = dma.done [#allocation3], 16
    $region17: #{tpu_custom_call.1} parent=1 // pred_fallthru
      _
    %309 = vsyncpa [#allocation3], 1

</llo_original>
